<compile_context>
chip_gen: v6e
topology: v6e:2x2x1
jax: 0.10.0
libtpu: 0.0.40
codegen_flags: <defaults>
</compile_context>

<pallas_src>
import functools

import jax
import jax.numpy as jnp
from jax.experimental import pallas as pl
from jax.experimental.pallas import tpu as pltpu


def _classifier_kernel(x_ref, wt_ref, b_ref, out_ref):
    # x_ref  : (t_tile, B, D_in)   input tile in native sequence-major layout
    # wt_ref : (D_in, D_out)       W.T, VMEM-resident across the grid
    # b_ref  : (1, D_out)          bias, VMEM-resident across the grid
    # out_ref: (B, t_tile, D_out)  batch-major output tile (lane-dense D_out)
    t_tile, B, d_in = x_ref.shape
    wt = wt_ref[...]
    bias = b_ref[...].astype(jnp.float32)          # (1, D_out)

    # The (t, b) -> (b, t) reorder happens through the refs: a strided VMEM
    # load per batch index and a contiguous store into the output slab. No
    # in-kernel vector transpose/reshape and no wrapper-side HBM round trip.
    for b in range(B):
        xb = x_ref[:, b, :]                        # (t_tile, D_in) strided VMEM load
        hb = jnp.dot(xb, wt, preferred_element_type=jnp.float32)
        hb = jnp.maximum(hb + bias, 0.0)           # Linear + ReLU, f32 accumulation
        out_ref[b, :, :] = hb.astype(out_ref.dtype)
    # TODO(synk): training-mode Dropout (PRNG mask + 1/(1-p) scaling) not
    # implemented; forward here matches inference semantics (dropout = identity).


def _pick_t_tile(T, B, d_in, itemsize, vmem_budget_bytes=8 << 20):
    """Largest t-tile (multiple of 8, or the full T) under a VMEM budget."""
    per_row = max(B * d_in * itemsize, 1)
    t = min(T, vmem_budget_bytes // per_row)
    if t >= T:
        return T
    return max(8, (t // 8) * 8)


@functools.partial(jax.jit, static_argnames=("t_tile",))
def classifier_forward(emotion, weight, bias, *, t_tile=None):
    """emotion: (T, B, D_in); weight: (D_out, D_in) = nn.Linear.weight; bias: (D_out,)."""
    T, B, d_in = emotion.shape
    d_out = weight.shape[0]
    if t_tile is None:
        t_tile = _pick_t_tile(T, B, d_in, emotion.dtype.itemsize)

    wt = weight.T                 # (D_in, D_out); tiny one-time transform
    b2 = bias.reshape(1, d_out)

    out = pl.pallas_call(
        _classifier_kernel,
        out_shape=jax.ShapeDtypeStruct((B, T, d_out), emotion.dtype),
        grid_spec=pltpu.PrefetchScalarGridSpec(
            num_scalar_prefetch=0,
            grid=(pl.cdiv(T, t_tile),),
            in_specs=[
                # x tile: (t_tile, B, D_in) — last two dims equal full array dims
                pl.BlockSpec((t_tile, B, d_in), lambda tt: (tt, 0, 0)),
                # weight / bias: constant block index -> stays VMEM-resident
                pl.BlockSpec((d_in, d_out), lambda tt: (0, 0)),
                pl.BlockSpec((1, d_out), lambda tt: (0, 0)),
            ],
            out_specs=pl.BlockSpec((B, t_tile, d_out), lambda tt: (0, tt, 0)),
        ),
        compiler_params=pltpu.CompilerParams(
            dimension_semantics=("parallel",),
        ),
    )(emotion, wt, b2)

    # (B, T, D_out) -> (B*T, D_out): free row-major collapse; matches the row
    # ordering of emotion.transpose(0,1).contiguous().view(-1, D_in) in PyTorch.
    return out.reshape(B * T, d_out)


def _reference(emotion, weight, bias):
    # Pure-JAX mirror of the PyTorch forward (Dropout in eval mode = identity).
    x = jnp.transpose(emotion, (1, 0, 2)).reshape(-1, emotion.shape[-1])
    return jax.nn.relu(x @ weight.T + bias)


if __name__ == "__main__":
    seq, batch = 16, 2
    input_size, output_size = 32, 8

    key = jax.random.PRNGKey(0)
    ke, kw, kb = jax.random.split(key, 3)

    emotion = jax.random.normal(ke, (seq, batch, input_size), dtype=jnp.float32)
    bound = 1.0 / (input_size ** 0.5)   # nn.Linear default init range
    weight = jax.random.uniform(kw, (output_size, input_size), jnp.float32, -bound, bound)
    bias = jax.random.uniform(kb, (output_size,), jnp.float32, -bound, bound)

    ref = _reference(emotion, weight, bias)

    # Explicit small tile -> exercises a 2-step pipelined grid with resident weights.
    out = jax.block_until_ready(classifier_forward(emotion, weight, bias, t_tile=8))
    assert out.shape == (batch * seq, output_size)
    assert jnp.allclose(out, ref, atol=1e-5, rtol=1e-5), "mismatch vs reference (t_tile=8)"

    # Auto tile-size path (whole sequence in one block at these shapes).
    out2 = jax.block_until_ready(classifier_forward(emotion, weight, bias))
    assert jnp.allclose(out2, ref, atol=1e-5, rtol=1e-5), "mismatch vs reference (auto tile)"

    print("KERNEL_OK")
</pallas_src>

<mosaic_0001>
module attributes {stable_mosaic.version = 11 : i64} {
  func.func @_classifier_kernel(%arg0: i32, %arg1: memref<8x2x32xf32, #tpu.memory_space<vmem>>, %arg2: memref<32x8xf32, #tpu.memory_space<vmem>>, %arg3: memref<1x8xf32, #tpu.memory_space<vmem>>, %arg4: memref<2x8x8xf32, #tpu.memory_space<vmem>>) attributes {dimension_semantics = [#tpu.dimension_semantics<parallel>], iteration_bounds = array<i64: 2>, scalar_prefetch = 0 : i64, scratch_operands = 0 : i64, tpu.core_type = #tpu.core_type<tc>, window_params = [{transform_indices = @transform_0, window_bounds = array<i64: 8, 2, 32>}, {pipeline_mode = #tpu.pipeline_mode<synchronous>, transform_indices = @transform_1, window_bounds = array<i64: 32, 8>}, {pipeline_mode = #tpu.pipeline_mode<synchronous>, transform_indices = @transform_2, window_bounds = array<i64: 1, 8>}, {transform_indices = @transform_3, window_bounds = array<i64: 2, 8, 8>}]} {
    %c0 = arith.constant 0 : index
    %c0_0 = arith.constant 0 : index
    %0 = vector.load %arg2[%c0, %c0_0] : memref<32x8xf32, #tpu.memory_space<vmem>>, vector<32x8xf32>
    %c0_1 = arith.constant 0 : index
    %c0_2 = arith.constant 0 : index
    %1 = vector.load %arg3[%c0_1, %c0_2] : memref<1x8xf32, #tpu.memory_space<vmem>>, vector<1x8xf32>
    %c0_3 = arith.constant 0 : index
    %c0_4 = arith.constant 0 : index
    %c0_5 = arith.constant 0 : index
    %2 = vector.load %arg1[%c0_3, %c0_4, %c0_5] : memref<8x2x32xf32, #tpu.memory_space<vmem>>, vector<8x1x32xf32>
    %3 = vector.shape_cast %2 : vector<8x1x32xf32> to vector<8x32xf32>
    %cst = arith.constant dense<0.000000e+00> : vector<8x8xf32>
    %4 = tpu.matmul %3, %0, %cst {dimension_numbers = #tpu.dot_dimension_numbers<[1], [0], [0], [1], [0, 0, 1, 1], [], []>} : vector<8x32xf32>, vector<32x8xf32>, vector<8x8xf32> -> vector<8x8xf32>
    %5 = vector.broadcast %1 : vector<1x8xf32> to vector<8x8xf32>
    %6 = arith.addf %4, %5 : vector<8x8xf32>
    %cst_6 = arith.constant 0.000000e+00 : f32
    %7 = vector.broadcast %cst_6 : f32 to vector<8x8xf32>
    %8 = arith.maximumf %6, %7 : vector<8x8xf32>
    %c0_7 = arith.constant 0 : index
    %c0_8 = arith.constant 0 : index
    %c0_9 = arith.constant 0 : index
    %9 = vector.load %arg4[%c0_7, %c0_8, %c0_9] : memref<2x8x8xf32, #tpu.memory_space<vmem>>, vector<1x8x8xf32>
    %10 = vector.shape_cast %9 : vector<1x8x8xf32> to vector<8x8xf32>
    %11 = vector.shape_cast %8 : vector<8x8xf32> to vector<1x8x8xf32>
    tpu.vector_store %arg4[%c0_7, %c0_8, %c0_9], %11 {strides = array<i32>} : memref<2x8x8xf32, #tpu.memory_space<vmem>>, vector<1x8x8xf32>,
    %c0_10 = arith.constant 0 : index
    %c1 = arith.constant 1 : index
    %c0_11 = arith.constant 0 : index
    %12 = vector.load %arg1[%c0_10, %c1, %c0_11] : memref<8x2x32xf32, #tpu.memory_space<vmem>>, vector<8x1x32xf32>
    %13 = vector.shape_cast %12 : vector<8x1x32xf32> to vector<8x32xf32>
    %cst_12 = arith.constant dense<0.000000e+00> : vector<8x8xf32>
    %14 = tpu.matmul %13, %0, %cst_12 {dimension_numbers = #tpu.dot_dimension_numbers<[1], [0], [0], [1], [0, 0, 1, 1], [], []>} : vector<8x32xf32>, vector<32x8xf32>, vector<8x8xf32> -> vector<8x8xf32>
    %15 = vector.broadcast %1 : vector<1x8xf32> to vector<8x8xf32>
    %16 = arith.addf %14, %15 : vector<8x8xf32>
    %cst_13 = arith.constant 0.000000e+00 : f32
    %17 = vector.broadcast %cst_13 : f32 to vector<8x8xf32>
    %18 = arith.maximumf %16, %17 : vector<8x8xf32>
    %c1_14 = arith.constant 1 : index
    %c0_15 = arith.constant 0 : index
    %c0_16 = arith.constant 0 : index
    %19 = vector.load %arg4[%c1_14, %c0_15, %c0_16] : memref<2x8x8xf32, #tpu.memory_space<vmem>>, vector<1x8x8xf32>
    %20 = vector.shape_cast %19 : vector<1x8x8xf32> to vector<8x8xf32>
    %21 = vector.shape_cast %18 : vector<8x8xf32> to vector<1x8x8xf32>
    tpu.vector_store %arg4[%c1_14, %c0_15, %c0_16], %21 {strides = array<i32>} : memref<2x8x8xf32, #tpu.memory_space<vmem>>, vector<1x8x8xf32>,
    return
  }
  func.func @transform_0(%arg0: i32) -> (i32, i32, i32) {
    %c0_i32 = arith.constant 0 : i32
    %c0_i32_0 = arith.constant 0 : i32
    %c0_i32_1 = arith.constant 0 : i32
    return %arg0, %c0_i32, %c0_i32_0 : i32, i32, i32
  }
  func.func @transform_1(%arg0: i32) -> (i32, i32) {
    %c0_i32 = arith.constant 0 : i32
    %c0_i32_0 = arith.constant 0 : i32
    %c0_i32_1 = arith.constant 0 : i32
    return %c0_i32, %c0_i32_0 : i32, i32
  }
  func.func @transform_2(%arg0: i32) -> (i32, i32) {
    %c0_i32 = arith.constant 0 : i32
    %c0_i32_0 = arith.constant 0 : i32
    %c0_i32_1 = arith.constant 0 : i32
    return %c0_i32, %c0_i32_0 : i32, i32
  }
  func.func @transform_3(%arg0: i32) -> (i32, i32, i32) {
    %c0_i32 = arith.constant 0 : i32
    %c0_i32_0 = arith.constant 0 : i32
    %c0_i32_1 = arith.constant 0 : i32
    return %c0_i32, %arg0, %c0_i32_0 : i32, i32, i32
  }
}

</mosaic_0001>

<llo_original>
// kernel: classifier_forward.1
$region0: #{classifier_forward.1}
  #allocation0 [shape = 'u32[]', space=smem, size = 0x4, offset = 0x4, fixed_abs, tag = 'smem constant byte address 0x4 - core index']
  #allocation1 [shape = 'u32[144,128]{1,0:T(1,128)}', space=vmem, size = 0x12000, scoped, tag = 'internal scratch']
  %s0 = inlined_call_operand.vmem [shape: f32[16,2,32], index: 0, kind: input, shape index: {}]
  %s1 = inlined_call_operand.vmem [shape: f32[32,8], index: 1, kind: input, shape index: {}]
  %s2 = inlined_call_operand.vmem [shape: f32[1,8], index: 2, kind: input, shape index: {}]
  %s3 = inlined_call_operand.vmem [shape: f32[2,16,8], index: 3, kind: output, shape index: {}]
  %s4 = sld [smem:[#allocation0]]
  $region79: #{classifier_forward.1} parent=0
    _
  %s6 = ssub.s32 1, %s4
  %s7 = scalar_select 0, %s6, %s4
  $region1: #{classifier_forward.1} parent=0
    #allocation2 [shape = 'u8[16384]{0}', space=vmem, size = 0x4000, scoped, tag = 'output window, operand 0']
    loop: start=0, step=1, limit=4
    $region2: #{classifier_forward.1} parent=1 // loop_pre_header
      _
    $region3: #{classifier_forward.1} parent=1 // loop_header
      %s9 = sphi 0, %s13
      %p10 = scmp.ge.s32.totalorder %s9, 4
      %s19 = sphi 0, %s21
      %s22 = sphi 0, %s19
      %s23 = sphi 0, %s22
      %s39 = sphi 0, %s23
      %s43 = sphi 0, %s43
      %s45 = sphi 0, %s43
      %s46 = sphi 0, %s45
      %s60 = sphi 0, %s46
      %s64 = sphi 0, %s64
      %s66 = sphi 0, %s64
      %s67 = sphi 0, %s66
      %s81 = sphi 0, %s67
      %s87 = sphi 0, %s89
      %s90 = sphi 0, %s87
      %s91 = sphi 0, %s90
      %s107 = sphi 0, %s91
    $region4: #{classifier_forward.1} parent=1 // loop_header_branch
      %12 = sbr.rel (%p10) target = $region8
    $region5: #{classifier_forward.1} parent=1 // loop_body
      %s14 = ssub.s32 %s9, 1
      %s15 = ssub.s32 %s9, 2
      %s16 = sadd.s32 %s9, 1
      %s17 = ssub.s32 %s9, %s16
      %p18 = scmp.eq.s32.totalorder %s17, 0
      %s20 = sadd.s32 %s19, 1
      %s21 = scalar_select %p18, %s19, %s20
      %p24 = pneg %p18
      %p25 = scmp.eq.s32.totalorder %s9, 1
      %p26 = por %p24, %p25
      %p27 = scmp.ne.s32.totalorder %s19, %s22
      %p28 = scmp.eq.s32.totalorder %s9, 0
      %p29 = por %p27, %p28
      %p30 = scmp.ne.s32.totalorder %s19, %s22
      %p31 = scmp.eq.s32.totalorder %s14, 1
      %p32 = por %p30, %p31
      %p33 = scmp.ne.s32.totalorder %s22, %s23
      %p34 = scmp.eq.s32.totalorder %s14, 0
      %p35 = por %p33, %p34
      %p36 = scmp.ne.s32.totalorder %s22, %s23
      %p37 = scmp.eq.s32.totalorder %s15, 1
      %p38 = por %p36, %p37
      %p40 = scmp.ne.s32.totalorder %s23, %s39
      %p41 = scmp.eq.s32.totalorder %s15, 0
      %p42 = por %p40, %p41
      %s44 = sadd.s32 %s43, 1
      %p47 = scmp.eq.s32.totalorder %s9, 1
      %p48 = scmp.ne.s32.totalorder %s43, %s45
      %p49 = scmp.eq.s32.totalorder %s9, 0
      %p50 = por %p48, %p49
      %p51 = scmp.ne.s32.totalorder %s43, %s45
      %p52 = scmp.eq.s32.totalorder %s14, 1
      %p53 = por %p51, %p52
      %p54 = scmp.ne.s32.totalorder %s45, %s46
      %p55 = scmp.eq.s32.totalorder %s14, 0
      %p56 = por %p54, %p55
      %p57 = scmp.ne.s32.totalorder %s45, %s46
      %p58 = scmp.eq.s32.totalorder %s15, 1
      %p59 = por %p57, %p58
      %p61 = scmp.ne.s32.totalorder %s46, %s60
      %p62 = scmp.eq.s32.totalorder %s15, 0
      %p63 = por %p61, %p62
      %s65 = sadd.s32 %s64, 1
      %p68 = scmp.eq.s32.totalorder %s9, 1
      %p69 = scmp.ne.s32.totalorder %s64, %s66
      %p70 = scmp.eq.s32.totalorder %s9, 0
      %p71 = por %p69, %p70
      %p72 = scmp.ne.s32.totalorder %s64, %s66
      %p73 = scmp.eq.s32.totalorder %s14, 1
      %p74 = por %p72, %p73
      %p75 = scmp.ne.s32.totalorder %s66, %s67
      %p76 = scmp.eq.s32.totalorder %s14, 0
      %p77 = por %p75, %p76
      %p78 = scmp.ne.s32.totalorder %s66, %s67
      %p79 = scmp.eq.s32.totalorder %s15, 1
      %p80 = por %p78, %p79
      %p82 = scmp.ne.s32.totalorder %s67, %s81
      %p83 = scmp.eq.s32.totalorder %s15, 0
      %p84 = por %p82, %p83
      %s85 = ssub.s32 %s9, %s16
      %p86 = scmp.eq.s32.totalorder %s85, 0
      %s88 = sadd.s32 %s87, 1
      %s89 = scalar_select %p86, %s87, %s88
      %p92 = pneg %p86
      %p93 = scmp.eq.s32.totalorder %s9, 1
      %p94 = por %p92, %p93
      %p95 = scmp.ne.s32.totalorder %s87, %s90
      %p96 = scmp.eq.s32.totalorder %s9, 0
      %p97 = por %p95, %p96
      %p98 = scmp.ne.s32.totalorder %s87, %s90
      %p99 = scmp.eq.s32.totalorder %s14, 1
      %p100 = por %p98, %p99
      %p101 = scmp.ne.s32.totalorder %s90, %s91
      %p102 = scmp.eq.s32.totalorder %s14, 0
      %p103 = por %p101, %p102
      %p104 = scmp.ne.s32.totalorder %s90, %s91
      %p105 = scmp.eq.s32.totalorder %s15, 1
      %p106 = por %p104, %p105
      %p108 = scmp.ne.s32.totalorder %s91, %s107
      %p109 = scmp.eq.s32.totalorder %s15, 0
      %p110 = por %p108, %p109
      %p111 = scmp.le.s32.totalorder 1, %s9
      %p112 = scmp.lt.s32.totalorder %s9, 3
      %p113 = pnand %p111, %p112
      %p114 = pneg %p113
      // Predicated region
      $region9: #{classifier_forward.1} parent=5 // pred_check
        _
      $region10: #{classifier_forward.1} parent=5 // pred_check_branch
        %116 = sbr.rel (%p113) target = $region12
      $region11: #{classifier_forward.1} parent=5 // pred_region
        %s117 = ssub.s32 %s9, 1
        // Predicated region
        $region13: #{classifier_forward.1} parent=11 // pred_check
          %p118 = pneg %p56
        $region14: #{classifier_forward.1} parent=11 // pred_check_branch
          %120 = sbr.rel (%p118) target = $region16
        $region15: #{classifier_forward.1} parent=11 // pred_region
          _
        $region16: #{classifier_forward.1} parent=11 // pred_fallthru
          _
        // Predicated region
        $region17: #{classifier_forward.1} parent=11 // pred_check
          %p121 = pneg %p77
        $region18: #{classifier_forward.1} parent=11 // pred_check_branch
          %123 = sbr.rel (%p121) target = $region20
        $region19: #{classifier_forward.1} parent=11 // pred_region
          _
        $region20: #{classifier_forward.1} parent=11 // pred_fallthru
          _
      $region12: #{classifier_forward.1} parent=5 // pred_fallthru
        _
      %p124 = scmp.lt.s32.totalorder %s9, 2
      // Predicated region
      $region21: #{classifier_forward.1} parent=5 // pred_check
        %p125 = pneg %p124
      $region22: #{classifier_forward.1} parent=5 // pred_check_branch
        %127 = sbr.rel (%p125) target = $region24
      $region23: #{classifier_forward.1} parent=5 // pred_region
        // Predicated region
        $region25: #{classifier_forward.1} parent=23 // pred_check
          %p128 = pneg %p29
        $region26: #{classifier_forward.1} parent=23 // pred_check_branch
          %130 = sbr.rel (%p128) target = $region28
        $region27: #{classifier_forward.1} parent=23 // pred_region
          %s131 = smul.u32 8, %s9
          %p132 = scmp.lt.s32.totalorder %s131, 15
          %s133 = scalar_select %p132, %s131, 15
          %s134 = smul.addr %s133, 2
          %s135 = scalar_lea.vmem %s0, %s134
          %s136 = smul.u32 8, %s9
        $region28: #{classifier_forward.1} parent=23 // pred_fallthru
          _
      $region24: #{classifier_forward.1} parent=5 // pred_fallthru
        _
      %p137 = scmp.le.s32.totalorder 1, %s9
      %p138 = scmp.lt.s32.totalorder %s9, 3
      %p139 = pnand %p137, %p138
      %p140 = pneg %p139
      // Predicated region
      $region29: #{classifier_forward.1} parent=5 // pred_check
        _
      $region30: #{classifier_forward.1} parent=5 // pred_check_branch
        %142 = sbr.rel (%p139) target = $region32
      $region31: #{classifier_forward.1} parent=5 // pred_region
        %s143 = ssub.s32 %s9, 1
        %s144 = smul.u32 8, %s14
        %p145 = scmp.lt.s32.totalorder %s144, 15
        %s146 = scalar_select %p145, %s144, 15
        %s147 = smul.addr %s146, 2
        %s148 = scalar_lea.vmem %s0, %s147
        %p149 = pneg %p35
        %p150 = pneg %p32
        %p151 = pneg %p56
        %p152 = pneg %p53
        %p153 = pneg %p77
        %p154 = pneg %p74
        %p155 = pneg %p103
        %p156 = pneg %p100
        %s157 = sand.u32 %s90, 1
        %s158 = sand.u32 %s90, 1
        %s159 = smul.addr %s158, 16
        %s160 = scalar_lea.vmem [#allocation2], %s159
        %s161 = smul.u32 8, %s14
        %p162 = scmp.lt.s32.totalorder %s161, 15
        %s163 = scalar_select %p162, %s161, 15
        %s164 = smul.addr %s163, 2
        %s165 = scalar_lea.vmem %s0, %s164
        %s166 = smul.u32 8, %s14
        %v167 = vld [vmem:[%s1] sm:$0xff]
        %v168 = vld [vmem:[%s1 + $0x8] sm:$0xff]
        %v169 = vld [vmem:[%s1 + $0x10] sm:$0xff]
        %v170 = vld [vmem:[%s1 + $0x18] sm:$0xff]
        %v171 = vld [vmem:[%s2] sm:$0x1]
        %v172 = vld [vmem:[%s165] sm:$0x1]
        %v173 = vld [vmem:[%s165 + $0x2] sm:$0x1]
        %v174 = vld [vmem:[%s165 + $0x4] sm:$0x1]
        %v175 = vld [vmem:[%s165 + $0x6] sm:$0x1]
        %v176 = vld [vmem:[%s165 + $0x8] sm:$0x1]
        %v177 = vld [vmem:[%s165 + $0xa] sm:$0x1]
        %v178 = vld [vmem:[%s165 + $0xc] sm:$0x1]
        %v179 = vld [vmem:[%s165 + $0xe] sm:$0x1]
        %v181 = vlaneseq
        %v182 = vshrl.u32 %v181, 7
        %v183 = vsub.s32 0, %v182
        %v184 = vrot.slane %v171, %v183
        %v194 = vrot.slane %v173, 7
        %vm195 = vcmask 1041409
        %v196 = vsel %vm195, %v194, %v172
        %v197 = vrot.slane %v174, 6
        %vm198 = vcmask 1042434
        %v199 = vsel %vm198, %v197, %v196
        %v200 = vrot.slane %v175, 5
        %vm201 = vcmask 1043459
        %v202 = vsel %vm201, %v200, %v199
        %v203 = vrot.slane %v176, 4
        %vm204 = vcmask 1044484
        %v205 = vsel %vm204, %v203, %v202
        %v206 = vrot.slane %v177, 3
        %vm207 = vcmask 1045509
        %v208 = vsel %vm207, %v206, %v205
        %v209 = vrot.slane %v178, 2
        %vm210 = vcmask 1046534
        %v211 = vsel %vm210, %v209, %v208
        %v212 = vrot.slane %v179, 1
        %vm213 = vcmask 1047559
        %v214 = vsel %vm213, %v212, %v211
        %vm215 = vcmask 261120
        %v216 = vsel %vm215, %v214, 0
        %218 = vmatprep.subr.mxu0 0.0
        %219 = vmatpush1.msra.mxu0 0.0
        %220 = vmatprep.subr.mxu0 0.0
        %221 = vmatpush1.msra.mxu0 0.0
        %222 = vmatprep.subr.mxu0 0.0
        %223 = vmatpush1.msra.mxu0 0.0
        %224 = vmatprep.subr.mxu0 0.0
        %225 = vmatpush1.msra.mxu0 0.0
        %226 = vmatprep.subr.mxu0 0.0
        %227 = vmatpush1.msra.mxu0 0.0
        %228 = vmatprep.subr.mxu0 0.0
        %229 = vmatpush1.msra.mxu0 0.0
        %230 = vmatprep.subr.mxu0 0.0
        %231 = vmatpush1.msra.mxu0 0.0
        %232 = vmatprep.subr.mxu0 0.0
        %233 = vmatpush1.msra.mxu0 0.0
        %234 = vmatprep.subr.mxu0 0.0
        %235 = vmatpush1.msra.mxu0 0.0
        %236 = vmatprep.subr.mxu0 0.0
        %237 = vmatpush1.msra.mxu0 0.0
        %238 = vmatprep.subr.mxu0 0.0
        %239 = vmatpush1.msra.mxu0 0.0
        %240 = vmatprep.subr.mxu0 0.0
        %241 = vmatpush1.msra.mxu0 0.0
        %242 = vmatprep.subr.mxu0 0.0
        %243 = vmatpush1.msra.mxu0 %v170
        %244 = vmatprep.subr.mxu0 0.0
        %245 = vmatpush1.msra.mxu0 %v169
        %246 = vmatprep.subr.mxu0 0.0
        %247 = vmatpush1.msra.mxu0 %v168
        %248 = vmatprep.subr.mxu0 0.0
        %249 = vmatpush1.msra.mxu0 %v167
        %250 = vmatprep.subr.mxu0 0.0
        %251 = vmatpush2.msra.mxu0 0.0
        %252 = vmatprep.subr.mxu0 0.0
        %253 = vmatpush2.msra.mxu0 0.0
        %254 = vmatprep.subr.mxu0 0.0
        %255 = vmatpush2.msra.mxu0 0.0
        %256 = vmatprep.subr.mxu0 0.0
        %257 = vmatpush2.msra.mxu0 0.0
        %258 = vmatprep.subr.mxu0 0.0
        %259 = vmatpush2.msra.mxu0 0.0
        %260 = vmatprep.subr.mxu0 0.0
        %261 = vmatpush2.msra.mxu0 0.0
        %262 = vmatprep.subr.mxu0 0.0
        %263 = vmatpush2.msra.mxu0 0.0
        %264 = vmatprep.subr.mxu0 0.0
        %265 = vmatpush2.msra.mxu0 0.0
        %266 = vmatprep.subr.mxu0 0.0
        %267 = vmatpush2.msra.mxu0 0.0
        %268 = vmatprep.subr.mxu0 0.0
        %269 = vmatpush2.msra.mxu0 0.0
        %270 = vmatprep.subr.mxu0 0.0
        %271 = vmatpush2.msra.mxu0 0.0
        %272 = vmatprep.subr.mxu0 0.0
        %273 = vmatpush2.msra.mxu0 0.0
        %274 = vmatprep.subr.mxu0 0.0
        %275 = vmatpush2.msra.mxu0 0.0
        %276 = vmatprep.subr.mxu0 0.0
        %277 = vmatpush2.msra.mxu0 0.0
        %278 = vmatprep.subr.mxu0 0.0
        %279 = vmatpush2.msra.mxu0 0.0
        %280 = vmatprep.subr.mxu0 0.0
        %281 = vmatpush2.msra.mxu0 0.0
        %282 = vmatprep.mubr.f32.mxu0 0.0
        %283 = vmatmul.mubr.f32.gmra.mxu0 %v216
        %v284 = vpop.f32.mrf.mxu0
        %v285 = vadd.f32 %v184, %v284
        %v286 = vpop.f32.mrf.mxu0
        %287 = vdwg.mxu0
        %v288 = vmax.f32 %v285, 0.0
        %vm289 = vcmask 64512
        %290 = vst.msk [vmem:[%s160] sm:$0xff] %vm289, %v288
        %v291 = vld [vmem:[%s165 + $0x1] sm:$0x1]
        %v292 = vld [vmem:[%s165 + $0x3] sm:$0x1]
        %v293 = vld [vmem:[%s165 + $0x5] sm:$0x1]
        %v294 = vld [vmem:[%s165 + $0x7] sm:$0x1]
        %v295 = vld [vmem:[%s165 + $0x9] sm:$0x1]
        %v296 = vld [vmem:[%s165 + $0xb] sm:$0x1]
        %v297 = vld [vmem:[%s165 + $0xd] sm:$0x1]
        %v298 = vld [vmem:[%s165 + $0xf] sm:$0x1]
        %v307 = vrot.slane %v292, 7
        %v308 = vsel %vm195, %v307, %v291
        %v309 = vrot.slane %v293, 6
        %v310 = vsel %vm198, %v309, %v308
        %v311 = vrot.slane %v294, 5
        %v312 = vsel %vm201, %v311, %v310
        %v313 = vrot.slane %v295, 4
        %v314 = vsel %vm204, %v313, %v312
        %v315 = vrot.slane %v296, 3
        %v316 = vsel %vm207, %v315, %v314
        %v317 = vrot.slane %v297, 2
        %v318 = vsel %vm210, %v317, %v316
        %v319 = vrot.slane %v298, 1
        %v320 = vsel %vm213, %v319, %v318
        %v321 = vsel %vm215, %v320, 0
        %323 = vmatprep.subr.mxu0 0.0
        %324 = vmatpush1.msra.mxu0 0.0
        %325 = vmatprep.subr.mxu0 0.0
        %326 = vmatpush1.msra.mxu0 0.0
        %327 = vmatprep.subr.mxu0 0.0
        %328 = vmatpush1.msra.mxu0 0.0
        %329 = vmatprep.subr.mxu0 0.0
        %330 = vmatpush1.msra.mxu0 0.0
        %331 = vmatprep.subr.mxu0 0.0
        %332 = vmatpush1.msra.mxu0 0.0
        %333 = vmatprep.subr.mxu0 0.0
        %334 = vmatpush1.msra.mxu0 0.0
        %335 = vmatprep.subr.mxu0 0.0
        %336 = vmatpush1.msra.mxu0 0.0
        %337 = vmatprep.subr.mxu0 0.0
        %338 = vmatpush1.msra.mxu0 0.0
        %339 = vmatprep.subr.mxu0 0.0
        %340 = vmatpush1.msra.mxu0 0.0
        %341 = vmatprep.subr.mxu0 0.0
        %342 = vmatpush1.msra.mxu0 0.0
        %343 = vmatprep.subr.mxu0 0.0
        %344 = vmatpush1.msra.mxu0 0.0
        %345 = vmatprep.subr.mxu0 0.0
        %346 = vmatpush1.msra.mxu0 0.0
        %347 = vmatprep.subr.mxu0 0.0
        %348 = vmatpush1.msra.mxu0 %v170
        %349 = vmatprep.subr.mxu0 0.0
        %350 = vmatpush1.msra.mxu0 %v169
        %351 = vmatprep.subr.mxu0 0.0
        %352 = vmatpush1.msra.mxu0 %v168
        %353 = vmatprep.subr.mxu0 0.0
        %354 = vmatpush1.msra.mxu0 %v167
        %355 = vmatprep.subr.mxu0 0.0
        %356 = vmatpush2.msra.mxu0 0.0
        %357 = vmatprep.subr.mxu0 0.0
        %358 = vmatpush2.msra.mxu0 0.0
        %359 = vmatprep.subr.mxu0 0.0
        %360 = vmatpush2.msra.mxu0 0.0
        %361 = vmatprep.subr.mxu0 0.0
        %362 = vmatpush2.msra.mxu0 0.0
        %363 = vmatprep.subr.mxu0 0.0
        %364 = vmatpush2.msra.mxu0 0.0
        %365 = vmatprep.subr.mxu0 0.0
        %366 = vmatpush2.msra.mxu0 0.0
        %367 = vmatprep.subr.mxu0 0.0
        %368 = vmatpush2.msra.mxu0 0.0
        %369 = vmatprep.subr.mxu0 0.0
        %370 = vmatpush2.msra.mxu0 0.0
        %371 = vmatprep.subr.mxu0 0.0
        %372 = vmatpush2.msra.mxu0 0.0
        %373 = vmatprep.subr.mxu0 0.0
        %374 = vmatpush2.msra.mxu0 0.0
        %375 = vmatprep.subr.mxu0 0.0
        %376 = vmatpush2.msra.mxu0 0.0
        %377 = vmatprep.subr.mxu0 0.0
        %378 = vmatpush2.msra.mxu0 0.0
        %379 = vmatprep.subr.mxu0 0.0
        %380 = vmatpush2.msra.mxu0 0.0
        %381 = vmatprep.subr.mxu0 0.0
        %382 = vmatpush2.msra.mxu0 0.0
        %383 = vmatprep.subr.mxu0 0.0
        %384 = vmatpush2.msra.mxu0 0.0
        %385 = vmatprep.subr.mxu0 0.0
        %386 = vmatpush2.msra.mxu0 0.0
        %387 = vmatprep.mubr.f32.mxu0 0.0
        %388 = vmatmul.mubr.f32.gmra.mxu0 %v321
        %v389 = vpop.f32.mrf.mxu0
        %v390 = vadd.f32 %v184, %v389
        %v391 = vpop.f32.mrf.mxu0
        %392 = vdwg.mxu0
        %v393 = vmax.f32 %v390, 0.0
        %s394 = scalar_lea.vmem %s160, 8 [#allocation2]
        %395 = vst.msk [vmem:[%s394] sm:$0xff] %vm289, %v393
        %s396 = sand.u32 %s90, 1
        %s397 = sand.u32 %s90, 1
        %s398 = smul.addr %s397, 16
        %s399 = scalar_lea.vmem [#allocation2], %s398
        // Predicated region
        $region33: #{classifier_forward.1} parent=31 // pred_check
          %p400 = pneg %p100
        $region34: #{classifier_forward.1} parent=31 // pred_check_branch
          %402 = sbr.rel (%p400) target = $region36
        $region35: #{classifier_forward.1} parent=31 // pred_region
          %s403 = smul.addr %s14, 8
          %s404 = scalar_lea.vmem %s3, %s403
          // Predicated region
          $region37: #{classifier_forward.1} parent=35 // pred_check
            _
          $region38: #{classifier_forward.1} parent=35 // pred_check_branch
            %406 = sbr.rel (0) target = $region40
          $region39: #{classifier_forward.1} parent=35 // pred_region
            // Predicated region
            $region41: #{classifier_forward.1} parent=39 // pred_check
              _
            $region42: #{classifier_forward.1} parent=39 // pred_check_branch
              %408 = sbr.rel (0) target = $region44
            $region43: #{classifier_forward.1} parent=39 // pred_region
              // Predicated region
              $region56: #{classifier_forward.1} parent=43 // pred_check
                _
              $region57: #{classifier_forward.1} parent=43 // pred_check_branch
                %426 = sbr.rel (0) target = $region59
              $region58: #{classifier_forward.1} parent=43 // pred_region
                loop: start=0, step=1, limit=1
                $region60: #{classifier_forward.1} parent=58 // loop_pre_header
                  _
                $region61: #{classifier_forward.1} parent=58 // loop_header
                  %s428 = sphi 0, %s432
                  %p429 = scmp.ge.s32.totalorder %s428, 1
                  %s433 = sphi %s399, %s399
                  %s434 = sphi %s404, %s404
                $region62: #{classifier_forward.1} parent=58 // loop_header_branch
                  %431 = sbr.rel (%p429) target = $region66
                $region63: #{classifier_forward.1} parent=58 // loop_body
                  %v435 = vld [vmem:[%s433] sm:$0xff]
                  %436 = vst [vmem:[%s434] sm:$0xff] %v435
                  %v437 = vld [vmem:[%s433 + $0x8] sm:$0xff]
                  %438 = vst [vmem:[%s434 + $0x10] sm:$0xff] %v437
                $region64: #{classifier_forward.1} parent=58 // loop_footer
                  %s432 = sadd.s32 1, %s428
                $region65: #{classifier_forward.1} parent=58 // loop_footer_branch
                  %427 = sbr.rel target = $region61
                $region66: #{classifier_forward.1} parent=58 // loop_exit
                  _
              $region59: #{classifier_forward.1} parent=43 // pred_fallthru
                _
              // Predicated region
              $region67: #{classifier_forward.1} parent=43 // pred_check
                _
              $region68: #{classifier_forward.1} parent=43 // pred_check_branch
                %440 = sbr.rel target = $region70
              $region69: #{classifier_forward.1} parent=43 // pred_region
                _
              $region70: #{classifier_forward.1} parent=43 // pred_fallthru
                _
            $region44: #{classifier_forward.1} parent=39 // pred_fallthru
              _
            // Predicated region
            $region45: #{classifier_forward.1} parent=39 // pred_check
              _
            $region46: #{classifier_forward.1} parent=39 // pred_check_branch
              %410 = sbr.rel target = $region48
            $region47: #{classifier_forward.1} parent=39 // pred_region
              %s412 = ssub.s32 256, 1
              loop: start=0, step=1, limit=1
              $region49: #{classifier_forward.1} parent=47 // loop_pre_header
                _
              $region50: #{classifier_forward.1} parent=47 // loop_header
                %s414 = sphi 0, %s418
                %p415 = scmp.ge.s32.totalorder %s414, 1
                %s419 = sphi %s399, %s399
                %s420 = sphi %s404, %s404
              $region51: #{classifier_forward.1} parent=47 // loop_header_branch
                %417 = sbr.rel (%p415) target = $region55
              $region52: #{classifier_forward.1} parent=47 // loop_body
                %v421 = vld [vmem:[%s419] sm:%s412]
                %422 = vst [vmem:[%s420] sm:%s412] %v421
                %v423 = vld [vmem:[%s419 + $0x8] sm:%s412]
                %424 = vst [vmem:[%s420 + $0x10] sm:%s412] %v423
              $region53: #{classifier_forward.1} parent=47 // loop_footer
                %s418 = sadd.s32 1, %s414
              $region54: #{classifier_forward.1} parent=47 // loop_footer_branch
                %413 = sbr.rel target = $region50
              $region55: #{classifier_forward.1} parent=47 // loop_exit
                _
            $region48: #{classifier_forward.1} parent=39 // pred_fallthru
              _
          $region40: #{classifier_forward.1} parent=35 // pred_fallthru
            _
          %441 = vnop
        $region36: #{classifier_forward.1} parent=31 // pred_fallthru
          _
      $region32: #{classifier_forward.1} parent=5 // pred_fallthru
        _
      %p442 = scmp.le.s32.totalorder 2, %s9
      // Predicated region
      $region71: #{classifier_forward.1} parent=5 // pred_check
        %p443 = pneg %p442
      $region72: #{classifier_forward.1} parent=5 // pred_check_branch
        %445 = sbr.rel (%p443) target = $region74
      $region73: #{classifier_forward.1} parent=5 // pred_region
        %s446 = ssub.s32 %s9, 2
        // Predicated region
        $region75: #{classifier_forward.1} parent=73 // pred_check
          %p447 = pneg %p106
        $region76: #{classifier_forward.1} parent=73 // pred_check_branch
          %449 = sbr.rel (%p447) target = $region78
        $region77: #{classifier_forward.1} parent=73 // pred_region
          %s450 = sand.u32 %s91, 1
          %s451 = sand.u32 %s91, 1
          %s452 = smul.addr %s451, 16
          %s453 = scalar_lea.vmem [#allocation2], %s452
        $region78: #{classifier_forward.1} parent=73 // pred_fallthru
          _
      $region74: #{classifier_forward.1} parent=5 // pred_fallthru
        _
    $region6: #{classifier_forward.1} parent=1 // loop_footer
      %s13 = sadd.s32 1, %s9
    $region7: #{classifier_forward.1} parent=1 // loop_footer_branch
      %8 = sbr.rel target = $region3
    $region8: #{classifier_forward.1} parent=1 // loop_exit
      _

</llo_original>
